<compile_context>
chip_gen: v5e
topology: v5e:2x2
jax: 0.10.0
libtpu: 0.0.40
codegen_flags: <defaults>
</compile_context>

<pallas_src>
import jax
import jax.numpy as jnp
import numpy as np
from jax import lax
from jax.experimental import pallas as pl
from jax.experimental.pallas import tpu as pltpu


def lstm_linear_kernel(x_ref, wih_ref, b_ref, whh_ref, wlin_ref, blin_ref,
                       y_ref, hn_ref, cn_ref, gx_sc, hs_sc):
    """x_ref:   (S*Bp, I)   time-major inputs, batch padded to Bp=8 rows
       wih_ref: (I, 4H)     input weight (pre-transposed)
       b_ref:   (1, 4H)     b_ih + b_hh
       whh_ref: (H, 4H)     recurrent weight (pre-transposed)
       wlin_ref:(H, C)      head weight (pre-transposed)
       blin_ref:(1, C)      head bias
       y_ref:   (S*Bp, C)   per-step logits (time-major, padded batch)
       hn_ref/cn_ref: (Bp, H) final states (padded batch)
       gx_sc:   (S*Bp, 4H)  VMEM scratch: input projection for all steps
       hs_sc:   (S*Bp, H)   VMEM scratch: hidden states for all steps."""
    Bp, H = hn_ref.shape
    S = x_ref.shape[0] // Bp

    # One MXU matmul for the whole non-recurrent input projection (all timesteps).
    gx_sc[...] = jnp.dot(x_ref[...], wih_ref[...],
                         preferred_element_type=jnp.float32) + b_ref[...]

    def step(t, carry):
        h, c = carry
        row = pl.multiple_of(t * Bp, 8)          # aligned full-tile sublane offset
        # Serial part only: recurrent matmul + cell update.
        gates = gx_sc[pl.ds(row, Bp), :] + jnp.dot(
            h, whh_ref[...], preferred_element_type=jnp.float32)   # (Bp, 4H)

        i = jax.nn.sigmoid(gates[:, 0 * H:1 * H])
        f = jax.nn.sigmoid(gates[:, 1 * H:2 * H])
        g = jnp.tanh(gates[:, 2 * H:3 * H])
        o = jax.nn.sigmoid(gates[:, 3 * H:4 * H])

        c = f * c + i * g
        h = o * jnp.tanh(c)
        hs_sc[pl.ds(row, Bp), :] = h
        return (h, c)

    h0 = jnp.zeros((Bp, H), jnp.float32)
    c0 = jnp.zeros((Bp, H), jnp.float32)
    h, c = lax.fori_loop(0, S, step, (h0, c0), unroll=True)

    hn_ref[...] = h.astype(hn_ref.dtype)
    cn_ref[...] = c.astype(cn_ref.dtype)

    # Fused classification head: one matmul over all timesteps.
    y_ref[...] = (jnp.dot(hs_sc[...], wlin_ref[...],
                          preferred_element_type=jnp.float32)
                  + blin_ref[...]).astype(y_ref.dtype)


@jax.jit
def lstm_linear_forward(X, w_ih, w_hh, b_ih, b_hh, w_lin, b_lin):
    """X: (batch, seq, input) float32; PyTorch-convention weights:
       w_ih (4H, I), w_hh (4H, H), b_ih/b_hh (4H,), w_lin (C, H), b_lin (C,)."""
    B, S, I = X.shape
    H = w_hh.shape[1]
    C = w_lin.shape[0]
    Bp = 8                                   # pad batch to a sublane multiple

    # Time-major, batch padded with zero rows, flattened to (S*Bp, I).
    x_tm = jnp.transpose(X, (1, 0, 2))                            # (S, B, I)
    x_tm = jnp.pad(x_tm, ((0, 0), (0, Bp - B), (0, 0)))           # (S, Bp, I)
    x_flat = x_tm.reshape(S * Bp, I)

    wih_t = jnp.transpose(w_ih)                                   # (I, 4H)
    b = (b_ih + b_hh).reshape(1, 4 * H)                           # (1, 4H)
    whh_t = jnp.transpose(w_hh)                                   # (H, 4H)
    wlin_t = jnp.transpose(w_lin)                                 # (H, C)
    blin = b_lin.reshape(1, C)                                    # (1, C)

    y_flat, h_n, c_n = pl.pallas_call(
        lstm_linear_kernel,
        out_shape=(
            jax.ShapeDtypeStruct((S * Bp, C), jnp.float32),
            jax.ShapeDtypeStruct((Bp, H), jnp.float32),
            jax.ShapeDtypeStruct((Bp, H), jnp.float32),
        ),
        grid_spec=pltpu.PrefetchScalarGridSpec(
            num_scalar_prefetch=0,
            grid=(1,),
            in_specs=[
                pl.BlockSpec((S * Bp, I), lambda i: (0, 0)),      # inputs
                pl.BlockSpec((I, 4 * H), lambda i: (0, 0)),       # W_ih^T
                pl.BlockSpec((1, 4 * H), lambda i: (0, 0)),       # b_ih + b_hh
                pl.BlockSpec((H, 4 * H), lambda i: (0, 0)),       # W_hh^T
                pl.BlockSpec((H, C), lambda i: (0, 0)),           # W_lin^T
                pl.BlockSpec((1, C), lambda i: (0, 0)),           # b_lin
            ],
            out_specs=[
                pl.BlockSpec((S * Bp, C), lambda i: (0, 0)),      # logits slab
                pl.BlockSpec((Bp, H), lambda i: (0, 0)),          # h_n (padded)
                pl.BlockSpec((Bp, H), lambda i: (0, 0)),          # c_n (padded)
            ],
            scratch_shapes=[
                pltpu.VMEM((S * Bp, 4 * H), jnp.float32),         # gate inputs
                pltpu.VMEM((S * Bp, H), jnp.float32),             # hidden states
            ],
        ),
        compiler_params=pltpu.CompilerParams(
            dimension_semantics=("arbitrary",)),
    )(x_flat, wih_t, b, whh_t, wlin_t, blin)

    # Un-pad + back to batch-first (all fused under the same jit).
    y = jnp.transpose(y_flat.reshape(S, Bp, C)[:, :B, :], (1, 0, 2))  # (B, S, C)
    # match PyTorch: hidden = (h_n, c_n), each (num_layers*dirs=1, B, H)
    return y, (h_n[None, :B, :], c_n[None, :B, :])


def reference_forward(X, w_ih, w_hh, b_ih, b_hh, w_lin, b_lin):
    """Pure-JAX reference matching torch.nn.LSTM + Linear semantics."""
    B, S, I = X.shape
    H = w_hh.shape[1]

    def step(carry, x_t):
        h, c = carry
        gates = x_t @ w_ih.T + b_ih + h @ w_hh.T + b_hh
        i = jax.nn.sigmoid(gates[:, 0 * H:1 * H])
        f = jax.nn.sigmoid(gates[:, 1 * H:2 * H])
        g = jnp.tanh(gates[:, 2 * H:3 * H])
        o = jax.nn.sigmoid(gates[:, 3 * H:4 * H])
        c = f * c + i * g
        h = o * jnp.tanh(c)
        return (h, c), h

    h0 = jnp.zeros((B, H), jnp.float32)
    (h_n, c_n), hs = jax.lax.scan(step, (h0, h0), jnp.transpose(X, (1, 0, 2)))
    hs = jnp.transpose(hs, (1, 0, 2))                              # (B, S, H)
    y = hs @ w_lin.T + b_lin
    return y, (h_n[None], c_n[None])


if __name__ == "__main__":
    # Small shapes consistent with the module (input_size, hidden_size, n_classes).
    B, S, I, H, C = 2, 8, 64, 32, 48

    key = jax.random.PRNGKey(0)
    ks = jax.random.split(key, 8)
    bound = 1.0 / np.sqrt(H)
    u = lambda k, shape: jax.random.uniform(k, shape, jnp.float32, -bound, bound)

    X = jax.random.normal(ks[0], (B, S, I), jnp.float32)
    w_ih = u(ks[1], (4 * H, I))
    w_hh = u(ks[2], (4 * H, H))
    b_ih = u(ks[3], (4 * H,))
    b_hh = u(ks[4], (4 * H,))
    w_lin = u(ks[5], (C, H))
    b_lin = u(ks[6], (C,))

    out, (h_n, c_n) = lstm_linear_forward(X, w_ih, w_hh, b_ih, b_hh, w_lin, b_lin)
    jax.block_until_ready(out)
    jax.block_until_ready(h_n)
    jax.block_until_ready(c_n)

    ref_out, (ref_h, ref_c) = reference_forward(X, w_ih, w_hh, b_ih, b_hh, w_lin, b_lin)
    assert out.shape == (B, S, C) and h_n.shape == (1, B, H) and c_n.shape == (1, B, H)
    np.testing.assert_allclose(np.asarray(out), np.asarray(ref_out), rtol=1e-5, atol=1e-5)
    np.testing.assert_allclose(np.asarray(h_n), np.asarray(ref_h), rtol=1e-5, atol=1e-5)
    np.testing.assert_allclose(np.asarray(c_n), np.asarray(ref_c), rtol=1e-5, atol=1e-5)

    print("KERNEL_OK")
</pallas_src>

<mosaic_0001>
module attributes {stable_mosaic.version = 11 : i64} {
  func.func @lstm_linear_kernel(%arg0: i32, %arg1: memref<64x64xf32, #tpu.memory_space<vmem>>, %arg2: memref<64x128xf32, #tpu.memory_space<vmem>>, %arg3: memref<1x128xf32, #tpu.memory_space<vmem>>, %arg4: memref<32x128xf32, #tpu.memory_space<vmem>>, %arg5: memref<32x48xf32, #tpu.memory_space<vmem>>, %arg6: memref<1x48xf32, #tpu.memory_space<vmem>>, %arg7: memref<64x48xf32, #tpu.memory_space<vmem>>, %arg8: memref<8x32xf32, #tpu.memory_space<vmem>>, %arg9: memref<8x32xf32, #tpu.memory_space<vmem>>, %arg10: memref<64x128xf32, #tpu.memory_space<vmem>>, %arg11: memref<64x32xf32, #tpu.memory_space<vmem>>) attributes {dimension_semantics = [#tpu.dimension_semantics<arbitrary>], iteration_bounds = array<i64: 1>, scalar_prefetch = 0 : i64, scratch_operands = 2 : i64, tpu.core_type = #tpu.core_type<tc>, window_params = [{pipeline_mode = #tpu.pipeline_mode<synchronous>, transform_indices = @transform_0, window_bounds = array<i64: 64, 64>}, {pipeline_mode = #tpu.pipeline_mode<synchronous>, transform_indices = @transform_1, window_bounds = array<i64: 64, 128>}, {pipeline_mode = #tpu.pipeline_mode<synchronous>, transform_indices = @transform_2, window_bounds = array<i64: 1, 128>}, {pipeline_mode = #tpu.pipeline_mode<synchronous>, transform_indices = @transform_3, window_bounds = array<i64: 32, 128>}, {pipeline_mode = #tpu.pipeline_mode<synchronous>, transform_indices = @transform_4, window_bounds = array<i64: 32, 48>}, {pipeline_mode = #tpu.pipeline_mode<synchronous>, transform_indices = @transform_5, window_bounds = array<i64: 1, 48>}, {pipeline_mode = #tpu.pipeline_mode<synchronous>, transform_indices = @transform_6, window_bounds = array<i64: 64, 48>}, {pipeline_mode = #tpu.pipeline_mode<synchronous>, transform_indices = @transform_7, window_bounds = array<i64: 8, 32>}, {pipeline_mode = #tpu.pipeline_mode<synchronous>, transform_indices = @transform_8, window_bounds = array<i64: 8, 32>}]} {
    %c0 = arith.constant 0 : index
    %c0_0 = arith.constant 0 : index
    %0 = vector.load %arg1[%c0, %c0_0] : memref<64x64xf32, #tpu.memory_space<vmem>>, vector<64x64xf32>
    %c0_1 = arith.constant 0 : index
    %c0_2 = arith.constant 0 : index
    %1 = vector.load %arg2[%c0_1, %c0_2] : memref<64x128xf32, #tpu.memory_space<vmem>>, vector<64x128xf32>
    %cst = arith.constant dense<0.000000e+00> : vector<64x128xf32>
    %2 = tpu.matmul %0, %1, %cst {dimension_numbers = #tpu.dot_dimension_numbers<[1], [0], [0], [1], [0, 0, 1, 1], [], []>} : vector<64x64xf32>, vector<64x128xf32>, vector<64x128xf32> -> vector<64x128xf32>
    %c0_3 = arith.constant 0 : index
    %c0_4 = arith.constant 0 : index
    %3 = vector.load %arg3[%c0_3, %c0_4] : memref<1x128xf32, #tpu.memory_space<vmem>>, vector<1x128xf32>
    %4 = vector.broadcast %3 : vector<1x128xf32> to vector<64x128xf32>
    %5 = arith.addf %2, %4 : vector<64x128xf32>
    %c0_5 = arith.constant 0 : index
    %c0_6 = arith.constant 0 : index
    %6 = vector.load %arg10[%c0_5, %c0_6] : memref<64x128xf32, #tpu.memory_space<vmem>>, vector<64x128xf32>
    tpu.vector_store %arg10[%c0_5, %c0_6], %5 {strides = array<i32>} : memref<64x128xf32, #tpu.memory_space<vmem>>, vector<64x128xf32>,
    %cst_7 = arith.constant 0.000000e+00 : f32
    %7 = vector.broadcast %cst_7 : f32 to vector<8x32xf32>
    %cst_8 = arith.constant 0.000000e+00 : f32
    %8 = vector.broadcast %cst_8 : f32 to vector<8x32xf32>
    %c0_i32 = arith.constant 0 : i32
    %c8_i32 = arith.constant 8 : i32
    %9 = arith.muli %c0_i32, %c8_i32 : i32
    %10 = tpu.assume_multiple %9, 8 : i32
    %11 = arith.index_cast %10 : i32 to index
    %c0_9 = arith.constant 0 : index
    %12 = vector.load %arg10[%11, %c0_9] : memref<64x128xf32, #tpu.memory_space<vmem>>, vector<8x128xf32>
    %c0_10 = arith.constant 0 : index
    %c0_11 = arith.constant 0 : index
    %13 = vector.load %arg4[%c0_10, %c0_11] : memref<32x128xf32, #tpu.memory_space<vmem>>, vector<32x128xf32>
    %cst_12 = arith.constant dense<0.000000e+00> : vector<8x128xf32>
    %14 = tpu.matmul %7, %13, %cst_12 {dimension_numbers = #tpu.dot_dimension_numbers<[1], [0], [0], [1], [0, 0, 1, 1], [], []>} : vector<8x32xf32>, vector<32x128xf32>, vector<8x128xf32> -> vector<8x128xf32>
    %15 = arith.addf %12, %14 : vector<8x128xf32>
    %16 = vector.extract_strided_slice %15 {offsets = [0, 0], sizes = [8, 32], strides = [1, 1]} : vector<8x128xf32> to vector<8x32xf32>
    %17 = arith.negf %16 : vector<8x32xf32>
    %18 = math.exp %17 : vector<8x32xf32>
    %cst_13 = arith.constant 1.000000e+00 : f32
    %19 = vector.broadcast %cst_13 : f32 to vector<8x32xf32>
    %20 = arith.addf %19, %18 : vector<8x32xf32>
    %21 = arith.divf %19, %20 : vector<8x32xf32>
    %22 = vector.extract_strided_slice %15 {offsets = [0, 32], sizes = [8, 32], strides = [1, 1]} : vector<8x128xf32> to vector<8x32xf32>
    %23 = arith.negf %22 : vector<8x32xf32>
    %24 = math.exp %23 : vector<8x32xf32>
    %cst_14 = arith.constant 1.000000e+00 : f32
    %25 = vector.broadcast %cst_14 : f32 to vector<8x32xf32>
    %26 = arith.addf %25, %24 : vector<8x32xf32>
    %27 = arith.divf %25, %26 : vector<8x32xf32>
    %28 = vector.extract_strided_slice %15 {offsets = [0, 64], sizes = [8, 32], strides = [1, 1]} : vector<8x128xf32> to vector<8x32xf32>
    %29 = math.tanh %28 : vector<8x32xf32>
    %30 = vector.extract_strided_slice %15 {offsets = [0, 96], sizes = [8, 32], strides = [1, 1]} : vector<8x128xf32> to vector<8x32xf32>
    %31 = arith.negf %30 : vector<8x32xf32>
    %32 = math.exp %31 : vector<8x32xf32>
    %cst_15 = arith.constant 1.000000e+00 : f32
    %33 = vector.broadcast %cst_15 : f32 to vector<8x32xf32>
    %34 = arith.addf %33, %32 : vector<8x32xf32>
    %35 = arith.divf %33, %34 : vector<8x32xf32>
    %36 = arith.mulf %27, %8 : vector<8x32xf32>
    %37 = arith.mulf %21, %29 : vector<8x32xf32>
    %38 = arith.addf %36, %37 : vector<8x32xf32>
    %39 = math.tanh %38 : vector<8x32xf32>
    %40 = arith.mulf %35, %39 : vector<8x32xf32>
    %41 = arith.index_cast %10 : i32 to index
    %c0_16 = arith.constant 0 : index
    %42 = vector.load %arg11[%41, %c0_16] : memref<64x32xf32, #tpu.memory_space<vmem>>, vector<8x32xf32>
    tpu.vector_store %arg11[%41, %c0_16], %40 {strides = array<i32>} : memref<64x32xf32, #tpu.memory_space<vmem>>, vector<8x32xf32>,
    %c1_i32 = arith.constant 1 : i32
    %c8_i32_17 = arith.constant 8 : i32
    %43 = arith.muli %c1_i32, %c8_i32_17 : i32
    %44 = tpu.assume_multiple %43, 8 : i32
    %45 = arith.index_cast %44 : i32 to index
    %c0_18 = arith.constant 0 : index
    %46 = vector.load %arg10[%45, %c0_18] : memref<64x128xf32, #tpu.memory_space<vmem>>, vector<8x128xf32>
    %c0_19 = arith.constant 0 : index
    %c0_20 = arith.constant 0 : index
    %47 = vector.load %arg4[%c0_19, %c0_20] : memref<32x128xf32, #tpu.memory_space<vmem>>, vector<32x128xf32>
    %cst_21 = arith.constant dense<0.000000e+00> : vector<8x128xf32>
    %48 = tpu.matmul %40, %47, %cst_21 {dimension_numbers = #tpu.dot_dimension_numbers<[1], [0], [0], [1], [0, 0, 1, 1], [], []>} : vector<8x32xf32>, vector<32x128xf32>, vector<8x128xf32> -> vector<8x128xf32>
    %49 = arith.addf %46, %48 : vector<8x128xf32>
    %50 = vector.extract_strided_slice %49 {offsets = [0, 0], sizes = [8, 32], strides = [1, 1]} : vector<8x128xf32> to vector<8x32xf32>
    %51 = arith.negf %50 : vector<8x32xf32>
    %52 = math.exp %51 : vector<8x32xf32>
    %cst_22 = arith.constant 1.000000e+00 : f32
    %53 = vector.broadcast %cst_22 : f32 to vector<8x32xf32>
    %54 = arith.addf %53, %52 : vector<8x32xf32>
    %55 = arith.divf %53, %54 : vector<8x32xf32>
    %56 = vector.extract_strided_slice %49 {offsets = [0, 32], sizes = [8, 32], strides = [1, 1]} : vector<8x128xf32> to vector<8x32xf32>
    %57 = arith.negf %56 : vector<8x32xf32>
    %58 = math.exp %57 : vector<8x32xf32>
    %cst_23 = arith.constant 1.000000e+00 : f32
    %59 = vector.broadcast %cst_23 : f32 to vector<8x32xf32>
    %60 = arith.addf %59, %58 : vector<8x32xf32>
    %61 = arith.divf %59, %60 : vector<8x32xf32>
    %62 = vector.extract_strided_slice %49 {offsets = [0, 64], sizes = [8, 32], strides = [1, 1]} : vector<8x128xf32> to vector<8x32xf32>
    %63 = math.tanh %62 : vector<8x32xf32>
    %64 = vector.extract_strided_slice %49 {offsets = [0, 96], sizes = [8, 32], strides = [1, 1]} : vector<8x128xf32> to vector<8x32xf32>
    %65 = arith.negf %64 : vector<8x32xf32>
    %66 = math.exp %65 : vector<8x32xf32>
    %cst_24 = arith.constant 1.000000e+00 : f32
    %67 = vector.broadcast %cst_24 : f32 to vector<8x32xf32>
    %68 = arith.addf %67, %66 : vector<8x32xf32>
    %69 = arith.divf %67, %68 : vector<8x32xf32>
    %70 = arith.mulf %61, %38 : vector<8x32xf32>
    %71 = arith.mulf %55, %63 : vector<8x32xf32>
    %72 = arith.addf %70, %71 : vector<8x32xf32>
    %73 = math.tanh %72 : vector<8x32xf32>
    %74 = arith.mulf %69, %73 : vector<8x32xf32>
    %75 = arith.index_cast %44 : i32 to index
    %c0_25 = arith.constant 0 : index
    %76 = vector.load %arg11[%75, %c0_25] : memref<64x32xf32, #tpu.memory_space<vmem>>, vector<8x32xf32>
    tpu.vector_store %arg11[%75, %c0_25], %74 {strides = array<i32>} : memref<64x32xf32, #tpu.memory_space<vmem>>, vector<8x32xf32>,
    %c2_i32 = arith.constant 2 : i32
    %c8_i32_26 = arith.constant 8 : i32
    %77 = arith.muli %c2_i32, %c8_i32_26 : i32
    %78 = tpu.assume_multiple %77, 8 : i32
    %79 = arith.index_cast %78 : i32 to index
    %c0_27 = arith.constant 0 : index
    %80 = vector.load %arg10[%79, %c0_27] : memref<64x128xf32, #tpu.memory_space<vmem>>, vector<8x128xf32>
    %c0_28 = arith.constant 0 : index
    %c0_29 = arith.constant 0 : index
    %81 = vector.load %arg4[%c0_28, %c0_29] : memref<32x128xf32, #tpu.memory_space<vmem>>, vector<32x128xf32>
    %cst_30 = arith.constant dense<0.000000e+00> : vector<8x128xf32>
    %82 = tpu.matmul %74, %81, %cst_30 {dimension_numbers = #tpu.dot_dimension_numbers<[1], [0], [0], [1], [0, 0, 1, 1], [], []>} : vector<8x32xf32>, vector<32x128xf32>, vector<8x128xf32> -> vector<8x128xf32>
    %83 = arith.addf %80, %82 : vector<8x128xf32>
    %84 = vector.extract_strided_slice %83 {offsets = [0, 0], sizes = [8, 32], strides = [1, 1]} : vector<8x128xf32> to vector<8x32xf32>
    %85 = arith.negf %84 : vector<8x32xf32>
    %86 = math.exp %85 : vector<8x32xf32>
    %cst_31 = arith.constant 1.000000e+00 : f32
    %87 = vector.broadcast %cst_31 : f32 to vector<8x32xf32>
    %88 = arith.addf %87, %86 : vector<8x32xf32>
    %89 = arith.divf %87, %88 : vector<8x32xf32>
    %90 = vector.extract_strided_slice %83 {offsets = [0, 32], sizes = [8, 32], strides = [1, 1]} : vector<8x128xf32> to vector<8x32xf32>
    %91 = arith.negf %90 : vector<8x32xf32>
    %92 = math.exp %91 : vector<8x32xf32>
    %cst_32 = arith.constant 1.000000e+00 : f32
    %93 = vector.broadcast %cst_32 : f32 to vector<8x32xf32>
    %94 = arith.addf %93, %92 : vector<8x32xf32>
    %95 = arith.divf %93, %94 : vector<8x32xf32>
    %96 = vector.extract_strided_slice %83 {offsets = [0, 64], sizes = [8, 32], strides = [1, 1]} : vector<8x128xf32> to vector<8x32xf32>
    %97 = math.tanh %96 : vector<8x32xf32>
    %98 = vector.extract_strided_slice %83 {offsets = [0, 96], sizes = [8, 32], strides = [1, 1]} : vector<8x128xf32> to vector<8x32xf32>
    %99 = arith.negf %98 : vector<8x32xf32>
    %100 = math.exp %99 : vector<8x32xf32>
    %cst_33 = arith.constant 1.000000e+00 : f32
    %101 = vector.broadcast %cst_33 : f32 to vector<8x32xf32>
    %102 = arith.addf %101, %100 : vector<8x32xf32>
    %103 = arith.divf %101, %102 : vector<8x32xf32>
    %104 = arith.mulf %95, %72 : vector<8x32xf32>
    %105 = arith.mulf %89, %97 : vector<8x32xf32>
    %106 = arith.addf %104, %105 : vector<8x32xf32>
    %107 = math.tanh %106 : vector<8x32xf32>
    %108 = arith.mulf %103, %107 : vector<8x32xf32>
    %109 = arith.index_cast %78 : i32 to index
    %c0_34 = arith.constant 0 : index
    %110 = vector.load %arg11[%109, %c0_34] : memref<64x32xf32, #tpu.memory_space<vmem>>, vector<8x32xf32>
    tpu.vector_store %arg11[%109, %c0_34], %108 {strides = array<i32>} : memref<64x32xf32, #tpu.memory_space<vmem>>, vector<8x32xf32>,
    %c3_i32 = arith.constant 3 : i32
    %c8_i32_35 = arith.constant 8 : i32
    %111 = arith.muli %c3_i32, %c8_i32_35 : i32
    %112 = tpu.assume_multiple %111, 8 : i32
    %113 = arith.index_cast %112 : i32 to index
    %c0_36 = arith.constant 0 : index
    %114 = vector.load %arg10[%113, %c0_36] : memref<64x128xf32, #tpu.memory_space<vmem>>, vector<8x128xf32>
    %c0_37 = arith.constant 0 : index
    %c0_38 = arith.constant 0 : index
    %115 = vector.load %arg4[%c0_37, %c0_38] : memref<32x128xf32, #tpu.memory_space<vmem>>, vector<32x128xf32>
    %cst_39 = arith.constant dense<0.000000e+00> : vector<8x128xf32>
    %116 = tpu.matmul %108, %115, %cst_39 {dimension_numbers = #tpu.dot_dimension_numbers<[1], [0], [0], [1], [0, 0, 1, 1], [], []>} : vector<8x32xf32>, vector<32x128xf32>, vector<8x128xf32> -> vector<8x128xf32>
    %117 = arith.addf %114, %116 : vector<8x128xf32>
    %118 = vector.extract_strided_slice %117 {offsets = [0, 0], sizes = [8, 32], strides = [1, 1]} : vector<8x128xf32> to vector<8x32xf32>
    %119 = arith.negf %118 : vector<8x32xf32>
    %120 = math.exp %119 : vector<8x32xf32>
    %cst_40 = arith.constant 1.000000e+00 : f32
    %121 = vector.broadcast %cst_40 : f32 to vector<8x32xf32>
    %122 = arith.addf %121, %120 : vector<8x32xf32>
    %123 = arith.divf %121, %122 : vector<8x32xf32>
    %124 = vector.extract_strided_slice %117 {offsets = [0, 32], sizes = [8, 32], strides = [1, 1]} : vector<8x128xf32> to vector<8x32xf32>
    %125 = arith.negf %124 : vector<8x32xf32>
    %126 = math.exp %125 : vector<8x32xf32>
    %cst_41 = arith.constant 1.000000e+00 : f32
    %127 = vector.broadcast %cst_41 : f32 to vector<8x32xf32>
    %128 = arith.addf %127, %126 : vector<8x32xf32>
    %129 = arith.divf %127, %128 : vector<8x32xf32>
    %130 = vector.extract_strided_slice %117 {offsets = [0, 64], sizes = [8, 32], strides = [1, 1]} : vector<8x128xf32> to vector<8x32xf32>
    %131 = math.tanh %130 : vector<8x32xf32>
    %132 = vector.extract_strided_slice %117 {offsets = [0, 96], sizes = [8, 32], strides = [1, 1]} : vector<8x128xf32> to vector<8x32xf32>
    %133 = arith.negf %132 : vector<8x32xf32>
    %134 = math.exp %133 : vector<8x32xf32>
    %cst_42 = arith.constant 1.000000e+00 : f32
    %135 = vector.broadcast %cst_42 : f32 to vector<8x32xf32>
    %136 = arith.addf %135, %134 : vector<8x32xf32>
    %137 = arith.divf %135, %136 : vector<8x32xf32>
    %138 = arith.mulf %129, %106 : vector<8x32xf32>
    %139 = arith.mulf %123, %131 : vector<8x32xf32>
    %140 = arith.addf %138, %139 : vector<8x32xf32>
    %141 = math.tanh %140 : vector<8x32xf32>
    %142 = arith.mulf %137, %141 : vector<8x32xf32>
    %143 = arith.index_cast %112 : i32 to index
    %c0_43 = arith.constant 0 : index
    %144 = vector.load %arg11[%143, %c0_43] : memref<64x32xf32, #tpu.memory_space<vmem>>, vector<8x32xf32>
    tpu.vector_store %arg11[%143, %c0_43], %142 {strides = array<i32>} : memref<64x32xf32, #tpu.memory_space<vmem>>, vector<8x32xf32>,
    %c4_i32 = arith.constant 4 : i32
    %c8_i32_44 = arith.constant 8 : i32
    %145 = arith.muli %c4_i32, %c8_i32_44 : i32
    %146 = tpu.assume_multiple %145, 8 : i32
    %147 = arith.index_cast %146 : i32 to index
    %c0_45 = arith.constant 0 : index
    %148 = vector.load %arg10[%147, %c0_45] : memref<64x128xf32, #tpu.memory_space<vmem>>, vector<8x128xf32>
    %c0_46 = arith.constant 0 : index
    %c0_47 = arith.constant 0 : index
    %149 = vector.load %arg4[%c0_46, %c0_47] : memref<32x128xf32, #tpu.memory_space<vmem>>, vector<32x128xf32>
    %cst_48 = arith.constant dense<0.000000e+00> : vector<8x128xf32>
    %150 = tpu.matmul %142, %149, %cst_48 {dimension_numbers = #tpu.dot_dimension_numbers<[1], [0], [0], [1], [0, 0, 1, 1], [], []>} : vector<8x32xf32>, vector<32x128xf32>, vector<8x128xf32> -> vector<8x128xf32>
    %151 = arith.addf %148, %150 : vector<8x128xf32>
    %152 = vector.extract_strided_slice %151 {offsets = [0, 0], sizes = [8, 32], strides = [1, 1]} : vector<8x128xf32> to vector<8x32xf32>
    %153 = arith.negf %152 : vector<8x32xf32>
    %154 = math.exp %153 : vector<8x32xf32>
    %cst_49 = arith.constant 1.000000e+00 : f32
    %155 = vector.broadcast %cst_49 : f32 to vector<8x32xf32>
    %156 = arith.addf %155, %154 : vector<8x32xf32>
    %157 = arith.divf %155, %156 : vector<8x32xf32>
    %158 = vector.extract_strided_slice %151 {offsets = [0, 32], sizes = [8, 32], strides = [1, 1]} : vector<8x128xf32> to vector<8x32xf32>
    %159 = arith.negf %158 : vector<8x32xf32>
    %160 = math.exp %159 : vector<8x32xf32>
    %cst_50 = arith.constant 1.000000e+00 : f32
    %161 = vector.broadcast %cst_50 : f32 to vector<8x32xf32>
    %162 = arith.addf %161, %160 : vector<8x32xf32>
    %163 = arith.divf %161, %162 : vector<8x32xf32>
    %164 = vector.extract_strided_slice %151 {offsets = [0, 64], sizes = [8, 32], strides = [1, 1]} : vector<8x128xf32> to vector<8x32xf32>
    %165 = math.tanh %164 : vector<8x32xf32>
    %166 = vector.extract_strided_slice %151 {offsets = [0, 96], sizes = [8, 32], strides = [1, 1]} : vector<8x128xf32> to vector<8x32xf32>
    %167 = arith.negf %166 : vector<8x32xf32>
    %168 = math.exp %167 : vector<8x32xf32>
    %cst_51 = arith.constant 1.000000e+00 : f32
    %169 = vector.broadcast %cst_51 : f32 to vector<8x32xf32>
    %170 = arith.addf %169, %168 : vector<8x32xf32>
    %171 = arith.divf %169, %170 : vector<8x32xf32>
    %172 = arith.mulf %163, %140 : vector<8x32xf32>
    %173 = arith.mulf %157, %165 : vector<8x32xf32>
    %174 = arith.addf %172, %173 : vector<8x32xf32>
    %175 = math.tanh %174 : vector<8x32xf32>
    %176 = arith.mulf %171, %175 : vector<8x32xf32>
    %177 = arith.index_cast %146 : i32 to index
    %c0_52 = arith.constant 0 : index
    %178 = vector.load %arg11[%177, %c0_52] : memref<64x32xf32, #tpu.memory_space<vmem>>, vector<8x32xf32>
    tpu.vector_store %arg11[%177, %c0_52], %176 {strides = array<i32>} : memref<64x32xf32, #tpu.memory_space<vmem>>, vector<8x32xf32>,
    %c5_i32 = arith.constant 5 : i32
    %c8_i32_53 = arith.constant 8 : i32
    %179 = arith.muli %c5_i32, %c8_i32_53 : i32
    %180 = tpu.assume_multiple %179, 8 : i32
    %181 = arith.index_cast %180 : i32 to index
    %c0_54 = arith.constant 0 : index
    %182 = vector.load %arg10[%181, %c0_54] : memref<64x128xf32, #tpu.memory_space<vmem>>, vector<8x128xf32>
    %c0_55 = arith.constant 0 : index
    %c0_56 = arith.constant 0 : index
    %183 = vector.load %arg4[%c0_55, %c0_56] : memref<32x128xf32, #tpu.memory_space<vmem>>, vector<32x128xf32>
    %cst_57 = arith.constant dense<0.000000e+00> : vector<8x128xf32>
    %184 = tpu.matmul %176, %183, %cst_57 {dimension_numbers = #tpu.dot_dimension_numbers<[1], [0], [0], [1], [0, 0, 1, 1], [], []>} : vector<8x32xf32>, vector<32x128xf32>, vector<8x128xf32> -> vector<8x128xf32>
    %185 = arith.addf %182, %184 : vector<8x128xf32>
    %186 = vector.extract_strided_slice %185 {offsets = [0, 0], sizes = [8, 32], strides = [1, 1]} : vector<8x128xf32> to vector<8x32xf32>
    %187 = arith.negf %186 : vector<8x32xf32>
    %188 = math.exp %187 : vector<8x32xf32>
    %cst_58 = arith.constant 1.000000e+00 : f32
    %189 = vector.broadcast %cst_58 : f32 to vector<8x32xf32>
    %190 = arith.addf %189, %188 : vector<8x32xf32>
    %191 = arith.divf %189, %190 : vector<8x32xf32>
    %192 = vector.extract_strided_slice %185 {offsets = [0, 32], sizes = [8, 32], strides = [1, 1]} : vector<8x128xf32> to vector<8x32xf32>
    %193 = arith.negf %192 : vector<8x32xf32>
    %194 = math.exp %193 : vector<8x32xf32>
    %cst_59 = arith.constant 1.000000e+00 : f32
    %195 = vector.broadcast %cst_59 : f32 to vector<8x32xf32>
    %196 = arith.addf %195, %194 : vector<8x32xf32>
    %197 = arith.divf %195, %196 : vector<8x32xf32>
    %198 = vector.extract_strided_slice %185 {offsets = [0, 64], sizes = [8, 32], strides = [1, 1]} : vector<8x128xf32> to vector<8x32xf32>
    %199 = math.tanh %198 : vector<8x32xf32>
    %200 = vector.extract_strided_slice %185 {offsets = [0, 96], sizes = [8, 32], strides = [1, 1]} : vector<8x128xf32> to vector<8x32xf32>
    %201 = arith.negf %200 : vector<8x32xf32>
    %202 = math.exp %201 : vector<8x32xf32>
    %cst_60 = arith.constant 1.000000e+00 : f32
    %203 = vector.broadcast %cst_60 : f32 to vector<8x32xf32>
    %204 = arith.addf %203, %202 : vector<8x32xf32>
    %205 = arith.divf %203, %204 : vector<8x32xf32>
    %206 = arith.mulf %197, %174 : vector<8x32xf32>
    %207 = arith.mulf %191, %199 : vector<8x32xf32>
    %208 = arith.addf %206, %207 : vector<8x32xf32>
    %209 = math.tanh %208 : vector<8x32xf32>
    %210 = arith.mulf %205, %209 : vector<8x32xf32>
    %211 = arith.index_cast %180 : i32 to index
    %c0_61 = arith.constant 0 : index
    %212 = vector.load %arg11[%211, %c0_61] : memref<64x32xf32, #tpu.memory_space<vmem>>, vector<8x32xf32>
    tpu.vector_store %arg11[%211, %c0_61], %210 {strides = array<i32>} : memref<64x32xf32, #tpu.memory_space<vmem>>, vector<8x32xf32>,
    %c6_i32 = arith.constant 6 : i32
    %c8_i32_62 = arith.constant 8 : i32
    %213 = arith.muli %c6_i32, %c8_i32_62 : i32
    %214 = tpu.assume_multiple %213, 8 : i32
    %215 = arith.index_cast %214 : i32 to index
    %c0_63 = arith.constant 0 : index
    %216 = vector.load %arg10[%215, %c0_63] : memref<64x128xf32, #tpu.memory_space<vmem>>, vector<8x128xf32>
    %c0_64 = arith.constant 0 : index
    %c0_65 = arith.constant 0 : index
    %217 = vector.load %arg4[%c0_64, %c0_65] : memref<32x128xf32, #tpu.memory_space<vmem>>, vector<32x128xf32>
    %cst_66 = arith.constant dense<0.000000e+00> : vector<8x128xf32>
    %218 = tpu.matmul %210, %217, %cst_66 {dimension_numbers = #tpu.dot_dimension_numbers<[1], [0], [0], [1], [0, 0, 1, 1], [], []>} : vector<8x32xf32>, vector<32x128xf32>, vector<8x128xf32> -> vector<8x128xf32>
    %219 = arith.addf %216, %218 : vector<8x128xf32>
    %220 = vector.extract_strided_slice %219 {offsets = [0, 0], sizes = [8, 32], strides = [1, 1]} : vector<8x128xf32> to vector<8x32xf32>
    %221 = arith.negf %220 : vector<8x32xf32>
    %222 = math.exp %221 : vector<8x32xf32>
    %cst_67 = arith.constant 1.000000e+00 : f32
    %223 = vector.broadcast %cst_67 : f32 to vector<8x32xf32>
    %224 = arith.addf %223, %222 : vector<8x32xf32>
    %225 = arith.divf %223, %224 : vector<8x32xf32>
    %226 = vector.extract_strided_slice %219 {offsets = [0, 32], sizes = [8, 32], strides = [1, 1]} : vector<8x128xf32> to vector<8x32xf32>
    %227 = arith.negf %226 : vector<8x32xf32>
    %228 = math.exp %227 : vector<8x32xf32>
    %cst_68 = arith.constant 1.000000e+00 : f32
    %229 = vector.broadcast %cst_68 : f32 to vector<8x32xf32>
    %230 = arith.addf %229, %228 : vector<8x32xf32>
    %231 = arith.divf %229, %230 : vector<8x32xf32>
    %232 = vector.extract_strided_slice %219 {offsets = [0, 64], sizes = [8, 32], strides = [1, 1]} : vector<8x128xf32> to vector<8x32xf32>
    %233 = math.tanh %232 : vector<8x32xf32>
    %234 = vector.extract_strided_slice %219 {offsets = [0, 96], sizes = [8, 32], strides = [1, 1]} : vector<8x128xf32> to vector<8x32xf32>
    %235 = arith.negf %234 : vector<8x32xf32>
    %236 = math.exp %235 : vector<8x32xf32>
    %cst_69 = arith.constant 1.000000e+00 : f32
    %237 = vector.broadcast %cst_69 : f32 to vector<8x32xf32>
    %238 = arith.addf %237, %236 : vector<8x32xf32>
    %239 = arith.divf %237, %238 : vector<8x32xf32>
    %240 = arith.mulf %231, %208 : vector<8x32xf32>
    %241 = arith.mulf %225, %233 : vector<8x32xf32>
    %242 = arith.addf %240, %241 : vector<8x32xf32>
    %243 = math.tanh %242 : vector<8x32xf32>
    %244 = arith.mulf %239, %243 : vector<8x32xf32>
    %245 = arith.index_cast %214 : i32 to index
    %c0_70 = arith.constant 0 : index
    %246 = vector.load %arg11[%245, %c0_70] : memref<64x32xf32, #tpu.memory_space<vmem>>, vector<8x32xf32>
    tpu.vector_store %arg11[%245, %c0_70], %244 {strides = array<i32>} : memref<64x32xf32, #tpu.memory_space<vmem>>, vector<8x32xf32>,
    %c7_i32 = arith.constant 7 : i32
    %c8_i32_71 = arith.constant 8 : i32
    %247 = arith.muli %c7_i32, %c8_i32_71 : i32
    %248 = tpu.assume_multiple %247, 8 : i32
    %249 = arith.index_cast %248 : i32 to index
    %c0_72 = arith.constant 0 : index
    %250 = vector.load %arg10[%249, %c0_72] : memref<64x128xf32, #tpu.memory_space<vmem>>, vector<8x128xf32>
    %c0_73 = arith.constant 0 : index
    %c0_74 = arith.constant 0 : index
    %251 = vector.load %arg4[%c0_73, %c0_74] : memref<32x128xf32, #tpu.memory_space<vmem>>, vector<32x128xf32>
    %cst_75 = arith.constant dense<0.000000e+00> : vector<8x128xf32>
    %252 = tpu.matmul %244, %251, %cst_75 {dimension_numbers = #tpu.dot_dimension_numbers<[1], [0], [0], [1], [0, 0, 1, 1], [], []>} : vector<8x32xf32>, vector<32x128xf32>, vector<8x128xf32> -> vector<8x128xf32>
    %253 = arith.addf %250, %252 : vector<8x128xf32>
    %254 = vector.extract_strided_slice %253 {offsets = [0, 0], sizes = [8, 32], strides = [1, 1]} : vector<8x128xf32> to vector<8x32xf32>
    %255 = arith.negf %254 : vector<8x32xf32>
    %256 = math.exp %255 : vector<8x32xf32>
    %cst_76 = arith.constant 1.000000e+00 : f32
    %257 = vector.broadcast %cst_76 : f32 to vector<8x32xf32>
    %258 = arith.addf %257, %256 : vector<8x32xf32>
    %259 = arith.divf %257, %258 : vector<8x32xf32>
    %260 = vector.extract_strided_slice %253 {offsets = [0, 32], sizes = [8, 32], strides = [1, 1]} : vector<8x128xf32> to vector<8x32xf32>
    %261 = arith.negf %260 : vector<8x32xf32>
    %262 = math.exp %261 : vector<8x32xf32>
    %cst_77 = arith.constant 1.000000e+00 : f32
    %263 = vector.broadcast %cst_77 : f32 to vector<8x32xf32>
    %264 = arith.addf %263, %262 : vector<8x32xf32>
    %265 = arith.divf %263, %264 : vector<8x32xf32>
    %266 = vector.extract_strided_slice %253 {offsets = [0, 64], sizes = [8, 32], strides = [1, 1]} : vector<8x128xf32> to vector<8x32xf32>
    %267 = math.tanh %266 : vector<8x32xf32>
    %268 = vector.extract_strided_slice %253 {offsets = [0, 96], sizes = [8, 32], strides = [1, 1]} : vector<8x128xf32> to vector<8x32xf32>
    %269 = arith.negf %268 : vector<8x32xf32>
    %270 = math.exp %269 : vector<8x32xf32>
    %cst_78 = arith.constant 1.000000e+00 : f32
    %271 = vector.broadcast %cst_78 : f32 to vector<8x32xf32>
    %272 = arith.addf %271, %270 : vector<8x32xf32>
    %273 = arith.divf %271, %272 : vector<8x32xf32>
    %274 = arith.mulf %265, %242 : vector<8x32xf32>
    %275 = arith.mulf %259, %267 : vector<8x32xf32>
    %276 = arith.addf %274, %275 : vector<8x32xf32>
    %277 = math.tanh %276 : vector<8x32xf32>
    %278 = arith.mulf %273, %277 : vector<8x32xf32>
    %279 = arith.index_cast %248 : i32 to index
    %c0_79 = arith.constant 0 : index
    %280 = vector.load %arg11[%279, %c0_79] : memref<64x32xf32, #tpu.memory_space<vmem>>, vector<8x32xf32>
    tpu.vector_store %arg11[%279, %c0_79], %278 {strides = array<i32>} : memref<64x32xf32, #tpu.memory_space<vmem>>, vector<8x32xf32>,
    %c8_i32_80 = arith.constant 8 : i32
    %c0_81 = arith.constant 0 : index
    %c0_82 = arith.constant 0 : index
    %281 = vector.load %arg8[%c0_81, %c0_82] : memref<8x32xf32, #tpu.memory_space<vmem>>, vector<8x32xf32>
    tpu.vector_store %arg8[%c0_81, %c0_82], %278 {strides = array<i32>} : memref<8x32xf32, #tpu.memory_space<vmem>>, vector<8x32xf32>,
    %c0_83 = arith.constant 0 : index
    %c0_84 = arith.constant 0 : index
    %282 = vector.load %arg9[%c0_83, %c0_84] : memref<8x32xf32, #tpu.memory_space<vmem>>, vector<8x32xf32>
    tpu.vector_store %arg9[%c0_83, %c0_84], %276 {strides = array<i32>} : memref<8x32xf32, #tpu.memory_space<vmem>>, vector<8x32xf32>,
    %c0_85 = arith.constant 0 : index
    %c0_86 = arith.constant 0 : index
    %283 = vector.load %arg11[%c0_85, %c0_86] : memref<64x32xf32, #tpu.memory_space<vmem>>, vector<64x32xf32>
    %c0_87 = arith.constant 0 : index
    %c0_88 = arith.constant 0 : index
    %284 = vector.load %arg5[%c0_87, %c0_88] : memref<32x48xf32, #tpu.memory_space<vmem>>, vector<32x48xf32>
    %cst_89 = arith.constant dense<0.000000e+00> : vector<64x48xf32>
    %285 = tpu.matmul %283, %284, %cst_89 {dimension_numbers = #tpu.dot_dimension_numbers<[1], [0], [0], [1], [0, 0, 1, 1], [], []>} : vector<64x32xf32>, vector<32x48xf32>, vector<64x48xf32> -> vector<64x48xf32>
    %c0_90 = arith.constant 0 : index
    %c0_91 = arith.constant 0 : index
    %286 = vector.load %arg6[%c0_90, %c0_91] : memref<1x48xf32, #tpu.memory_space<vmem>>, vector<1x48xf32>
    %287 = vector.broadcast %286 : vector<1x48xf32> to vector<64x48xf32>
    %288 = arith.addf %285, %287 : vector<64x48xf32>
    %c0_92 = arith.constant 0 : index
    %c0_93 = arith.constant 0 : index
    %289 = vector.load %arg7[%c0_92, %c0_93] : memref<64x48xf32, #tpu.memory_space<vmem>>, vector<64x48xf32>
    tpu.vector_store %arg7[%c0_92, %c0_93], %288 {strides = array<i32>} : memref<64x48xf32, #tpu.memory_space<vmem>>, vector<64x48xf32>,
    return
  }
  func.func @transform_0(%arg0: i32) -> (i32, i32) {
    %c0_i32 = arith.constant 0 : i32
    %c0_i32_0 = arith.constant 0 : i32
    %c0_i32_1 = arith.constant 0 : i32
    return %c0_i32, %c0_i32_0 : i32, i32
  }
  func.func @transform_1(%arg0: i32) -> (i32, i32) {
    %c0_i32 = arith.constant 0 : i32
    %c0_i32_0 = arith.constant 0 : i32
    %c0_i32_1 = arith.constant 0 : i32
    return %c0_i32, %c0_i32_0 : i32, i32
  }
  func.func @transform_2(%arg0: i32) -> (i32, i32) {
    %c0_i32 = arith.constant 0 : i32
    %c0_i32_0 = arith.constant 0 : i32
    %c0_i32_1 = arith.constant 0 : i32
    return %c0_i32, %c0_i32_0 : i32, i32
  }
  func.func @transform_3(%arg0: i32) -> (i32, i32) {
    %c0_i32 = arith.constant 0 : i32
    %c0_i32_0 = arith.constant 0 : i32
    %c0_i32_1 = arith.constant 0 : i32
    return %c0_i32, %c0_i32_0 : i32, i32
  }
  func.func @transform_4(%arg0: i32) -> (i32, i32) {
    %c0_i32 = arith.constant 0 : i32
    %c0_i32_0 = arith.constant 0 : i32
    %c0_i32_1 = arith.constant 0 : i32
    return %c0_i32, %c0_i32_0 : i32, i32
  }
  func.func @transform_5(%arg0: i32) -> (i32, i32) {
    %c0_i32 = arith.constant 0 : i32
    %c0_i32_0 = arith.constant 0 : i32
    %c0_i32_1 = arith.constant 0 : i32
    return %c0_i32, %c0_i32_0 : i32, i32
  }
  func.func @transform_6(%arg0: i32) -> (i32, i32) {
    %c0_i32 = arith.constant 0 : i32
    %c0_i32_0 = arith.constant 0 : i32
    %c0_i32_1 = arith.constant 0 : i32
    return %c0_i32, %c0_i32_0 : i32, i32
  }
  func.func @transform_7(%arg0: i32) -> (i32, i32) {
    %c0_i32 = arith.constant 0 : i32
    %c0_i32_0 = arith.constant 0 : i32
    %c0_i32_1 = arith.constant 0 : i32
    return %c0_i32, %c0_i32_0 : i32, i32
  }
  func.func @transform_8(%arg0: i32) -> (i32, i32) {
    %c0_i32 = arith.constant 0 : i32
    %c0_i32_0 = arith.constant 0 : i32
    %c0_i32_1 = arith.constant 0 : i32
    return %c0_i32, %c0_i32_0 : i32, i32
  }
}

</mosaic_0001>

<llo_original>
// kernel: lstm_linear_forward.1
$region0: #{lstm_linear_forward.1}
  #allocation0 [shape = 'u32[]', space=smem, size = 0x4, offset = 0x4, fixed_abs, tag = 'smem constant byte address 0x4 - core index']
  #allocation1 [shape = 'u32[72,128]{1,0:T(1,128)}', space=vmem, size = 0x9000, scoped, tag = 'internal scratch']
  #allocation2 [shape = 'f32[64,128]{1,0:T(8,128)}', space=vmem, size = 0x8000, scoped, tag = 'scratch operand']
  #allocation3 [shape = 'f32[64,32]{1,0:T(8,128)}', space=vmem, size = 0x8000, scoped, tag = 'scratch operand']
  %s0 = inlined_call_operand.vmem [shape: f32[64,64], index: 0, kind: input, shape index: {}]
  %s1 = inlined_call_operand.vmem [shape: f32[64,128], index: 1, kind: input, shape index: {}]
  %s2 = inlined_call_operand.vmem [shape: f32[1,128], index: 2, kind: input, shape index: {}]
  %s3 = inlined_call_operand.vmem [shape: f32[32,128], index: 3, kind: input, shape index: {}]
  %s4 = inlined_call_operand.hbm [shape: f32[32,48], index: 4, kind: input, shape index: {}]
  %s5 = inlined_call_operand.vmem [shape: f32[1,48], index: 5, kind: input, shape index: {}]
  %s6 = inlined_call_operand.vmem [shape: f32[64,48], index: 6, kind: output, shape index: {0}]
  %s7 = inlined_call_operand.vmem [shape: f32[8,32], index: 7, kind: output, shape index: {1}]
  %s8 = inlined_call_operand.vmem [shape: f32[8,32], index: 8, kind: output, shape index: {2}]
  %9 = xla_tuple %s6, %s7, %s8
  %s10 = sld [smem:[#allocation0]]
  $region54: #{lstm_linear_forward.1} parent=0
    _
  %s12 = ssub.s32 1, %s10
  %s13 = scalar_select 0, %s12, %s10
  $region1: #{lstm_linear_forward.1} parent=0
    #allocation4 [shape = 'u8[16384]{0}', space=vmem, size = 0x4000, scoped, tag = 'input window, operand 4, single buffered']
    #allocation5 [shape = 's32[1]{0}', space=sflag, size = 0x4, scoped, tag = 'scoped memory for lstm_linear_forward.1']
    %14 = vsyncpa [#allocation5], 0
    // Predicated region
    $region2: #{lstm_linear_forward.1} parent=1 // pred_check
      _
    $region3: #{lstm_linear_forward.1} parent=1 // pred_check_branch
      %16 = sbr.rel (0) target = $region5
    $region4: #{lstm_linear_forward.1} parent=1 // pred_region
      _
    $region5: #{lstm_linear_forward.1} parent=1 // pred_fallthru
      _
    // Predicated region
    $region6: #{lstm_linear_forward.1} parent=1 // pred_check
      _
    $region7: #{lstm_linear_forward.1} parent=1 // pred_check_branch
      %18 = sbr.rel (0) target = $region9
    $region8: #{lstm_linear_forward.1} parent=1 // pred_region
      _
    $region9: #{lstm_linear_forward.1} parent=1 // pred_fallthru
      _
    // Predicated region
    $region10: #{lstm_linear_forward.1} parent=1 // pred_check
      _
    $region11: #{lstm_linear_forward.1} parent=1 // pred_check_branch
      %20 = sbr.rel (0) target = $region13
    $region12: #{lstm_linear_forward.1} parent=1 // pred_region
      _
    $region13: #{lstm_linear_forward.1} parent=1 // pred_fallthru
      _
    // Predicated region
    $region14: #{lstm_linear_forward.1} parent=1 // pred_check
      _
    $region15: #{lstm_linear_forward.1} parent=1 // pred_check_branch
      %22 = sbr.rel (0) target = $region17
    $region16: #{lstm_linear_forward.1} parent=1 // pred_region
      _
    $region17: #{lstm_linear_forward.1} parent=1 // pred_fallthru
      _
    // Predicated region
    $region18: #{lstm_linear_forward.1} parent=1 // pred_check
      _
    $region19: #{lstm_linear_forward.1} parent=1 // pred_check_branch
      %24 = sbr.rel (0) target = $region21
    $region20: #{lstm_linear_forward.1} parent=1 // pred_region
      %26 = vsyncadd [#allocation5], 0
      %s27 = sshll.u32 %s4, 4
      %s28 = int_to_ptr.hbm [resolvable:$true] %s27
      %s29 = sshll.u32 [#allocation4], 4
      %s30 = int_to_ptr.vmem [resolvable:$true] %s29
      %35 = dma.hbm_to_vmem [thread:$0]  %s28, 512, %s30, [#allocation5], 128, 128, 8
    $region21: #{lstm_linear_forward.1} parent=1 // pred_fallthru
      _
    // Predicated region
    $region22: #{lstm_linear_forward.1} parent=1 // pred_check
      _
    $region23: #{lstm_linear_forward.1} parent=1 // pred_check_branch
      %37 = sbr.rel (0) target = $region25
    $region24: #{lstm_linear_forward.1} parent=1 // pred_region
      _
    $region25: #{lstm_linear_forward.1} parent=1 // pred_fallthru
      _
    // Predicated region
    $region26: #{lstm_linear_forward.1} parent=1 // pred_check
      _
    $region27: #{lstm_linear_forward.1} parent=1 // pred_check_branch
      %39 = sbr.rel (0) target = $region29
    $region28: #{lstm_linear_forward.1} parent=1 // pred_region
      %41 = dma.done [#allocation5], 512
    $region29: #{lstm_linear_forward.1} parent=1 // pred_fallthru
      _
    %v42 = vld [vmem:[%s0] sm:$0xff]
    %v43 = vld [vmem:[%s0 + $0x8] sm:$0xff]
    %v44 = vld [vmem:[%s0 + $0x10] sm:$0xff]
    %v45 = vld [vmem:[%s0 + $0x18] sm:$0xff]
    %v46 = vld [vmem:[%s0 + $0x20] sm:$0xff]
    %v47 = vld [vmem:[%s0 + $0x28] sm:$0xff]
    %v48 = vld [vmem:[%s0 + $0x30] sm:$0xff]
    %v49 = vld [vmem:[%s0 + $0x38] sm:$0xff]
    %v50 = vld [vmem:[%s1] sm:$0xff]
    %v51 = vld [vmem:[%s1 + $0x8] sm:$0xff]
    %v52 = vld [vmem:[%s1 + $0x10] sm:$0xff]
    %v53 = vld [vmem:[%s1 + $0x18] sm:$0xff]
    %v54 = vld [vmem:[%s1 + $0x20] sm:$0xff]
    %v55 = vld [vmem:[%s1 + $0x28] sm:$0xff]
    %v56 = vld [vmem:[%s1 + $0x30] sm:$0xff]
    %v57 = vld [vmem:[%s1 + $0x38] sm:$0xff]
    %v58 = vld [vmem:[%s2] sm:$0x1]
    %v60 = vperm.slane %v58, 0
    %vm62 = vcmask 523264
    %v64 = vsel %vm62, %v42, 0
    %v67 = vsel %vm62, %v43, 0
    %v70 = vsel %vm62, %v44, 0
    %v73 = vsel %vm62, %v45, 0
    %v76 = vsel %vm62, %v46, 0
    %v79 = vsel %vm62, %v47, 0
    %v82 = vsel %vm62, %v48, 0
    %v85 = vsel %vm62, %v49, 0
    %87 = vmatpush.msra.mxu0 0.0
    %88 = vmatpush.msra.mxu0 0.0
    %89 = vmatpush.msra.mxu0 0.0
    %90 = vmatpush.msra.mxu0 0.0
    %91 = vmatpush.msra.mxu0 0.0
    %92 = vmatpush.msra.mxu0 0.0
    %93 = vmatpush.msra.mxu0 0.0
    %94 = vmatpush.msra.mxu0 0.0
    %95 = vmatpush.msra.mxu0 %v57
    %96 = vmatpush.msra.mxu0 %v56
    %97 = vmatpush.msra.mxu0 %v55
    %98 = vmatpush.msra.mxu0 %v54
    %99 = vmatpush.msra.mxu0 %v53
    %100 = vmatpush.msra.mxu0 %v52
    %101 = vmatpush.msra.mxu0 %v51
    %102 = vmatpush.msra.mxu0 %v50
    %103 = vmatmul.f32.gmra.mxu0 %v64
    %v104 = vpop.f32.mrf.mxu0
    %v105 = vadd.f32 %v60, %v104
    %106 = vmatmul.f32.gmra.mxu0 %v67
    %v107 = vpop.f32.mrf.mxu0
    %v108 = vadd.f32 %v60, %v107
    %109 = vmatmul.f32.gmra.mxu0 %v70
    %v110 = vpop.f32.mrf.mxu0
    %v111 = vadd.f32 %v60, %v110
    %112 = vmatmul.f32.gmra.mxu0 %v73
    %v113 = vpop.f32.mrf.mxu0
    %v114 = vadd.f32 %v60, %v113
    %115 = vmatmul.f32.gmra.mxu0 %v76
    %v116 = vpop.f32.mrf.mxu0
    %v117 = vadd.f32 %v60, %v116
    %118 = vmatmul.f32.gmra.mxu0 %v79
    %v119 = vpop.f32.mrf.mxu0
    %v120 = vadd.f32 %v60, %v119
    %121 = vmatmul.f32.gmra.mxu0 %v82
    %v122 = vpop.f32.mrf.mxu0
    %v123 = vadd.f32 %v60, %v122
    %124 = vmatmul.f32.gmra.mxu0 %v85
    %v125 = vpop.f32.mrf.mxu0
    %v126 = vadd.f32 %v60, %v125
    %127 = vdwg.mxu0
    %128 = vst [vmem:[#allocation2] sm:$0xff] %v105
    %129 = vst [vmem:[#allocation2 + $0x8] sm:$0xff] %v108
    %130 = vst [vmem:[#allocation2 + $0x10] sm:$0xff] %v111
    %131 = vst [vmem:[#allocation2 + $0x18] sm:$0xff] %v114
    %132 = vst [vmem:[#allocation2 + $0x20] sm:$0xff] %v117
    %133 = vst [vmem:[#allocation2 + $0x28] sm:$0xff] %v120
    %134 = vst [vmem:[#allocation2 + $0x30] sm:$0xff] %v123
    %135 = vst [vmem:[#allocation2 + $0x38] sm:$0xff] %v126
    %v136 = vld [vmem:[#allocation2] sm:$0xff]
    %v137 = vld [vmem:[%s3] sm:$0xff]
    %v138 = vld [vmem:[%s3 + $0x8] sm:$0xff]
    %v139 = vld [vmem:[%s3 + $0x10] sm:$0xff]
    %v140 = vld [vmem:[%s3 + $0x18] sm:$0xff]
    %vm141 = vcmask 261120
    %v143 = vsel %vm141, 0.0, 0
    %145 = vmatpush.msra.mxu0 0.0
    %146 = vmatpush.msra.mxu0 0.0
    %147 = vmatpush.msra.mxu0 0.0
    %148 = vmatpush.msra.mxu0 0.0
    %149 = vmatpush.msra.mxu0 0.0
    %150 = vmatpush.msra.mxu0 0.0
    %151 = vmatpush.msra.mxu0 0.0
    %152 = vmatpush.msra.mxu0 0.0
    %153 = vmatpush.msra.mxu0 0.0
    %154 = vmatpush.msra.mxu0 0.0
    %155 = vmatpush.msra.mxu0 0.0
    %156 = vmatpush.msra.mxu0 0.0
    %157 = vmatpush.msra.mxu0 %v140
    %158 = vmatpush.msra.mxu0 %v139
    %159 = vmatpush.msra.mxu0 %v138
    %160 = vmatpush.msra.mxu0 %v137
    %161 = vmatmul.f32.gmra.mxu0 %v143
    %v162 = vpop.f32.mrf.mxu0
    %v163 = vadd.f32 0.0, %v162
    %164 = vdwg.mxu0
    %v165 = vadd.f32 %v136, %v163
    %v166 = vxor.u32 %v165, 2147483648
    %v167 = vmul.f32 %v166, 1.442695
    %v168 = vpow.pop %v167
    %v169 = vadd.f32 %v168, 1.0
    %v170 = vrcp.pop %v169
    %v171 = vmul.f32 %v169, %v170
    %v172 = vsub.f32 1.0, %v171
    %v173 = vmul.f32 %v170, %v172
    %v174 = vadd.f32 %v170, %v173
    %vm175 = vweird.f32 %v169
    %vm176 = vweird.f32 %v170
    %vm177 = vmor %vm175, %vm176
    %v178 = vsel %vm177, %v170, %v174
    %v179 = vand.u32 2147483647, %v169
    %vm180 = vcmp.eq.f32.partialorder %v179, 8.507059e+37
    %v181 = vand.u32 %v169, 2147483648
    %v182 = vor.u32 1.1754944e-38, %v181
    %v183 = vsel %vm180, %v182, %v178
    %v184 = vmul.f32 1.0, %v183
    %v185 = vtanh.pop %v165
    %v186 = vmul.f32 %v184, 0.0
    %188 = vrot.lane.b32.xlu0 %v185, 64
    %v189 = vpop.permute.xlu0 %188
    %v191 = vmul.f32 %v184, %v189
    %193 = vrot.lane.b32.xlu0 %v191, 32
    %v194 = vpop.permute.xlu0 %193
    %v196 = vadd.f32 %v186, %v194
    %v197 = vtanh.pop %v196
    %199 = vrot.lane.b32.xlu0 %v197, 64
    %v200 = vpop.permute.xlu0 %199
    %v202 = vmul.f32 %v184, %v200
    %204 = vrot.lane.b32.xlu0 %v202, 32
    %v205 = vpop.permute.xlu0 %204
    %207 = vst.msk [vmem:[#allocation3] sm:$0xff] %vm141, %v205
    %s208 = scalar_lea.vmem [#allocation2], 8
    %v209 = vld [vmem:[%s208] sm:$0xff]
    %v210 = vld [vmem:[%s3] sm:$0xff]
    %v211 = vld [vmem:[%s3 + $0x8] sm:$0xff]
    %v212 = vld [vmem:[%s3 + $0x10] sm:$0xff]
    %v213 = vld [vmem:[%s3 + $0x18] sm:$0xff]
    %v214 = vsel %vm141, %v205, 0
    %216 = vmatpush.msra.mxu0 0.0
    %217 = vmatpush.msra.mxu0 0.0
    %218 = vmatpush.msra.mxu0 0.0
    %219 = vmatpush.msra.mxu0 0.0
    %220 = vmatpush.msra.mxu0 0.0
    %221 = vmatpush.msra.mxu0 0.0
    %222 = vmatpush.msra.mxu0 0.0
    %223 = vmatpush.msra.mxu0 0.0
    %224 = vmatpush.msra.mxu0 0.0
    %225 = vmatpush.msra.mxu0 0.0
    %226 = vmatpush.msra.mxu0 0.0
    %227 = vmatpush.msra.mxu0 0.0
    %228 = vmatpush.msra.mxu0 %v213
    %229 = vmatpush.msra.mxu0 %v212
    %230 = vmatpush.msra.mxu0 %v211
    %231 = vmatpush.msra.mxu0 %v210
    %232 = vmatmul.f32.gmra.mxu0 %v214
    %v233 = vpop.f32.mrf.mxu0
    %v234 = vadd.f32 0.0, %v233
    %235 = vdwg.mxu0
    %v236 = vadd.f32 %v209, %v234
    %v237 = vxor.u32 %v236, 2147483648
    %v238 = vmul.f32 %v237, 1.442695
    %v239 = vpow.pop %v238
    %v240 = vadd.f32 %v239, 1.0
    %v241 = vrcp.pop %v240
    %v242 = vmul.f32 %v240, %v241
    %v243 = vsub.f32 1.0, %v242
    %v244 = vmul.f32 %v241, %v243
    %v245 = vadd.f32 %v241, %v244
    %vm246 = vweird.f32 %v240
    %vm247 = vweird.f32 %v241
    %vm248 = vmor %vm246, %vm247
    %v249 = vsel %vm248, %v241, %v245
    %v250 = vand.u32 2147483647, %v240
    %vm251 = vcmp.eq.f32.partialorder %v250, 8.507059e+37
    %v252 = vand.u32 %v240, 2147483648
    %v253 = vor.u32 1.1754944e-38, %v252
    %v254 = vsel %vm251, %v253, %v249
    %v255 = vmul.f32 1.0, %v254
    %v256 = vtanh.pop %v236
    %v257 = vmul.f32 %v255, %v196
    %259 = vrot.lane.b32.xlu0 %v256, 64
    %v260 = vpop.permute.xlu0 %259
    %v262 = vmul.f32 %v255, %v260
    %264 = vrot.lane.b32.xlu0 %v262, 32
    %v265 = vpop.permute.xlu0 %264
    %v267 = vadd.f32 %v257, %v265
    %v268 = vtanh.pop %v267
    %270 = vrot.lane.b32.xlu0 %v268, 64
    %v271 = vpop.permute.xlu0 %270
    %v273 = vmul.f32 %v255, %v271
    %275 = vrot.lane.b32.xlu0 %v273, 32
    %v276 = vpop.permute.xlu0 %275
    %s278 = scalar_lea.vmem [#allocation3], 8
    %279 = vst.msk [vmem:[%s278] sm:$0xff] %vm141, %v276
    %s280 = scalar_lea.vmem [#allocation2], 16
    %v281 = vld [vmem:[%s280] sm:$0xff]
    %v282 = vld [vmem:[%s3] sm:$0xff]
    %v283 = vld [vmem:[%s3 + $0x8] sm:$0xff]
    %v284 = vld [vmem:[%s3 + $0x10] sm:$0xff]
    %v285 = vld [vmem:[%s3 + $0x18] sm:$0xff]
    %v286 = vsel %vm141, %v276, 0
    %288 = vmatpush.msra.mxu0 0.0
    %289 = vmatpush.msra.mxu0 0.0
    %290 = vmatpush.msra.mxu0 0.0
    %291 = vmatpush.msra.mxu0 0.0
    %292 = vmatpush.msra.mxu0 0.0
    %293 = vmatpush.msra.mxu0 0.0
    %294 = vmatpush.msra.mxu0 0.0
    %295 = vmatpush.msra.mxu0 0.0
    %296 = vmatpush.msra.mxu0 0.0
    %297 = vmatpush.msra.mxu0 0.0
    %298 = vmatpush.msra.mxu0 0.0
    %299 = vmatpush.msra.mxu0 0.0
    %300 = vmatpush.msra.mxu0 %v285
    %301 = vmatpush.msra.mxu0 %v284
    %302 = vmatpush.msra.mxu0 %v283
    %303 = vmatpush.msra.mxu0 %v282
    %304 = vmatmul.f32.gmra.mxu0 %v286
    %v305 = vpop.f32.mrf.mxu0
    %v306 = vadd.f32 0.0, %v305
    %307 = vdwg.mxu0
    %v308 = vadd.f32 %v281, %v306
    %v309 = vxor.u32 %v308, 2147483648
    %v310 = vmul.f32 %v309, 1.442695
    %v311 = vpow.pop %v310
    %v312 = vadd.f32 %v311, 1.0
    %v313 = vrcp.pop %v312
    %v314 = vmul.f32 %v312, %v313
    %v315 = vsub.f32 1.0, %v314
    %v316 = vmul.f32 %v313, %v315
    %v317 = vadd.f32 %v313, %v316
    %vm318 = vweird.f32 %v312
    %vm319 = vweird.f32 %v313
    %vm320 = vmor %vm318, %vm319
    %v321 = vsel %vm320, %v313, %v317
    %v322 = vand.u32 2147483647, %v312
    %vm323 = vcmp.eq.f32.partialorder %v322, 8.507059e+37
    %v324 = vand.u32 %v312, 2147483648
    %v325 = vor.u32 1.1754944e-38, %v324
    %v326 = vsel %vm323, %v325, %v321
    %v327 = vmul.f32 1.0, %v326
    %v328 = vtanh.pop %v308
    %v329 = vmul.f32 %v327, %v267
    %331 = vrot.lane.b32.xlu0 %v328, 64
    %v332 = vpop.permute.xlu0 %331
    %v334 = vmul.f32 %v327, %v332
    %336 = vrot.lane.b32.xlu0 %v334, 32
    %v337 = vpop.permute.xlu0 %336
    %v339 = vadd.f32 %v329, %v337
    %v340 = vtanh.pop %v339
    %342 = vrot.lane.b32.xlu0 %v340, 64
    %v343 = vpop.permute.xlu0 %342
    %v345 = vmul.f32 %v327, %v343
    %347 = vrot.lane.b32.xlu0 %v345, 32
    %v348 = vpop.permute.xlu0 %347
    %s350 = scalar_lea.vmem [#allocation3], 16
    %351 = vst.msk [vmem:[%s350] sm:$0xff] %vm141, %v348
    %s352 = scalar_lea.vmem [#allocation2], 24
    %v353 = vld [vmem:[%s352] sm:$0xff]
    %v354 = vld [vmem:[%s3] sm:$0xff]
    %v355 = vld [vmem:[%s3 + $0x8] sm:$0xff]
    %v356 = vld [vmem:[%s3 + $0x10] sm:$0xff]
    %v357 = vld [vmem:[%s3 + $0x18] sm:$0xff]
    %v358 = vsel %vm141, %v348, 0
    %360 = vmatpush.msra.mxu0 0.0
    %361 = vmatpush.msra.mxu0 0.0
    %362 = vmatpush.msra.mxu0 0.0
    %363 = vmatpush.msra.mxu0 0.0
    %364 = vmatpush.msra.mxu0 0.0
    %365 = vmatpush.msra.mxu0 0.0
    %366 = vmatpush.msra.mxu0 0.0
    %367 = vmatpush.msra.mxu0 0.0
    %368 = vmatpush.msra.mxu0 0.0
    %369 = vmatpush.msra.mxu0 0.0
    %370 = vmatpush.msra.mxu0 0.0
    %371 = vmatpush.msra.mxu0 0.0
    %372 = vmatpush.msra.mxu0 %v357
    %373 = vmatpush.msra.mxu0 %v356
    %374 = vmatpush.msra.mxu0 %v355
    %375 = vmatpush.msra.mxu0 %v354
    %376 = vmatmul.f32.gmra.mxu0 %v358
    %v377 = vpop.f32.mrf.mxu0
    %v378 = vadd.f32 0.0, %v377
    %379 = vdwg.mxu0
    %v380 = vadd.f32 %v353, %v378
    %v381 = vxor.u32 %v380, 2147483648
    %v382 = vmul.f32 %v381, 1.442695
    %v383 = vpow.pop %v382
    %v384 = vadd.f32 %v383, 1.0
    %v385 = vrcp.pop %v384
    %v386 = vmul.f32 %v384, %v385
    %v387 = vsub.f32 1.0, %v386
    %v388 = vmul.f32 %v385, %v387
    %v389 = vadd.f32 %v385, %v388
    %vm390 = vweird.f32 %v384
    %vm391 = vweird.f32 %v385
    %vm392 = vmor %vm390, %vm391
    %v393 = vsel %vm392, %v385, %v389
    %v394 = vand.u32 2147483647, %v384
    %vm395 = vcmp.eq.f32.partialorder %v394, 8.507059e+37
    %v396 = vand.u32 %v384, 2147483648
    %v397 = vor.u32 1.1754944e-38, %v396
    %v398 = vsel %vm395, %v397, %v393
    %v399 = vmul.f32 1.0, %v398
    %v400 = vtanh.pop %v380
    %v401 = vmul.f32 %v399, %v339
    %403 = vrot.lane.b32.xlu0 %v400, 64
    %v404 = vpop.permute.xlu0 %403
    %v406 = vmul.f32 %v399, %v404
    %408 = vrot.lane.b32.xlu0 %v406, 32
    %v409 = vpop.permute.xlu0 %408
    %v411 = vadd.f32 %v401, %v409
    %v412 = vtanh.pop %v411
    %414 = vrot.lane.b32.xlu0 %v412, 64
    %v415 = vpop.permute.xlu0 %414
    %v417 = vmul.f32 %v399, %v415
    %419 = vrot.lane.b32.xlu0 %v417, 32
    %v420 = vpop.permute.xlu0 %419
    %s422 = scalar_lea.vmem [#allocation3], 24
    %423 = vst.msk [vmem:[%s422] sm:$0xff] %vm141, %v420
    %s424 = scalar_lea.vmem [#allocation2], 32
    %v425 = vld [vmem:[%s424] sm:$0xff]
    %v426 = vld [vmem:[%s3] sm:$0xff]
    %v427 = vld [vmem:[%s3 + $0x8] sm:$0xff]
    %v428 = vld [vmem:[%s3 + $0x10] sm:$0xff]
    %v429 = vld [vmem:[%s3 + $0x18] sm:$0xff]
    %v430 = vsel %vm141, %v420, 0
    %432 = vmatpush.msra.mxu0 0.0
    %433 = vmatpush.msra.mxu0 0.0
    %434 = vmatpush.msra.mxu0 0.0
    %435 = vmatpush.msra.mxu0 0.0
    %436 = vmatpush.msra.mxu0 0.0
    %437 = vmatpush.msra.mxu0 0.0
    %438 = vmatpush.msra.mxu0 0.0
    %439 = vmatpush.msra.mxu0 0.0
    %440 = vmatpush.msra.mxu0 0.0
    %441 = vmatpush.msra.mxu0 0.0
    %442 = vmatpush.msra.mxu0 0.0
    %443 = vmatpush.msra.mxu0 0.0
    %444 = vmatpush.msra.mxu0 %v429
    %445 = vmatpush.msra.mxu0 %v428
    %446 = vmatpush.msra.mxu0 %v427
    %447 = vmatpush.msra.mxu0 %v426
    %448 = vmatmul.f32.gmra.mxu0 %v430
    %v449 = vpop.f32.mrf.mxu0
    %v450 = vadd.f32 0.0, %v449
    %451 = vdwg.mxu0
    %v452 = vadd.f32 %v425, %v450
    %v453 = vxor.u32 %v452, 2147483648
    %v454 = vmul.f32 %v453, 1.442695
    %v455 = vpow.pop %v454
    %v456 = vadd.f32 %v455, 1.0
    %v457 = vrcp.pop %v456
    %v458 = vmul.f32 %v456, %v457
    %v459 = vsub.f32 1.0, %v458
    %v460 = vmul.f32 %v457, %v459
    %v461 = vadd.f32 %v457, %v460
    %vm462 = vweird.f32 %v456
    %vm463 = vweird.f32 %v457
    %vm464 = vmor %vm462, %vm463
    %v465 = vsel %vm464, %v457, %v461
    %v466 = vand.u32 2147483647, %v456
    %vm467 = vcmp.eq.f32.partialorder %v466, 8.507059e+37
    %v468 = vand.u32 %v456, 2147483648
    %v469 = vor.u32 1.1754944e-38, %v468
    %v470 = vsel %vm467, %v469, %v465
    %v471 = vmul.f32 1.0, %v470
    %v472 = vtanh.pop %v452
    %v473 = vmul.f32 %v471, %v411
    %475 = vrot.lane.b32.xlu0 %v472, 64
    %v476 = vpop.permute.xlu0 %475
    %v478 = vmul.f32 %v471, %v476
    %480 = vrot.lane.b32.xlu0 %v478, 32
    %v481 = vpop.permute.xlu0 %480
    %v483 = vadd.f32 %v473, %v481
    %v484 = vtanh.pop %v483
    %486 = vrot.lane.b32.xlu0 %v484, 64
    %v487 = vpop.permute.xlu0 %486
    %v489 = vmul.f32 %v471, %v487
    %491 = vrot.lane.b32.xlu0 %v489, 32
    %v492 = vpop.permute.xlu0 %491
    %s494 = scalar_lea.vmem [#allocation3], 32
    %495 = vst.msk [vmem:[%s494] sm:$0xff] %vm141, %v492
    %s496 = scalar_lea.vmem [#allocation2], 40
    %v497 = vld [vmem:[%s496] sm:$0xff]
    %v498 = vld [vmem:[%s3] sm:$0xff]
    %v499 = vld [vmem:[%s3 + $0x8] sm:$0xff]
    %v500 = vld [vmem:[%s3 + $0x10] sm:$0xff]
    %v501 = vld [vmem:[%s3 + $0x18] sm:$0xff]
    %v502 = vsel %vm141, %v492, 0
    %504 = vmatpush.msra.mxu0 0.0
    %505 = vmatpush.msra.mxu0 0.0
    %506 = vmatpush.msra.mxu0 0.0
    %507 = vmatpush.msra.mxu0 0.0
    %508 = vmatpush.msra.mxu0 0.0
    %509 = vmatpush.msra.mxu0 0.0
    %510 = vmatpush.msra.mxu0 0.0
    %511 = vmatpush.msra.mxu0 0.0
    %512 = vmatpush.msra.mxu0 0.0
    %513 = vmatpush.msra.mxu0 0.0
    %514 = vmatpush.msra.mxu0 0.0
    %515 = vmatpush.msra.mxu0 0.0
    %516 = vmatpush.msra.mxu0 %v501
    %517 = vmatpush.msra.mxu0 %v500
    %518 = vmatpush.msra.mxu0 %v499
    %519 = vmatpush.msra.mxu0 %v498
    %520 = vmatmul.f32.gmra.mxu0 %v502
    %v521 = vpop.f32.mrf.mxu0
    %v522 = vadd.f32 0.0, %v521
    %523 = vdwg.mxu0
    %v524 = vadd.f32 %v497, %v522
    %v525 = vxor.u32 %v524, 2147483648
    %v526 = vmul.f32 %v525, 1.442695
    %v527 = vpow.pop %v526
    %v528 = vadd.f32 %v527, 1.0
    %v529 = vrcp.pop %v528
    %v530 = vmul.f32 %v528, %v529
    %v531 = vsub.f32 1.0, %v530
    %v532 = vmul.f32 %v529, %v531
    %v533 = vadd.f32 %v529, %v532
    %vm534 = vweird.f32 %v528
    %vm535 = vweird.f32 %v529
    %vm536 = vmor %vm534, %vm535
    %v537 = vsel %vm536, %v529, %v533
    %v538 = vand.u32 2147483647, %v528
    %vm539 = vcmp.eq.f32.partialorder %v538, 8.507059e+37
    %v540 = vand.u32 %v528, 2147483648
    %v541 = vor.u32 1.1754944e-38, %v540
    %v542 = vsel %vm539, %v541, %v537
    %v543 = vmul.f32 1.0, %v542
    %v544 = vtanh.pop %v524
    %v545 = vmul.f32 %v543, %v483
    %547 = vrot.lane.b32.xlu0 %v544, 64
    %v548 = vpop.permute.xlu0 %547
    %v550 = vmul.f32 %v543, %v548
    %552 = vrot.lane.b32.xlu0 %v550, 32
    %v553 = vpop.permute.xlu0 %552
    %v555 = vadd.f32 %v545, %v553
    %v556 = vtanh.pop %v555
    %558 = vrot.lane.b32.xlu0 %v556, 64
    %v559 = vpop.permute.xlu0 %558
    %v561 = vmul.f32 %v543, %v559
    %563 = vrot.lane.b32.xlu0 %v561, 32
    %v564 = vpop.permute.xlu0 %563
    %s566 = scalar_lea.vmem [#allocation3], 40
    %567 = vst.msk [vmem:[%s566] sm:$0xff] %vm141, %v564
    %s568 = scalar_lea.vmem [#allocation2], 48
    %v569 = vld [vmem:[%s568] sm:$0xff]
    %v570 = vld [vmem:[%s3] sm:$0xff]
    %v571 = vld [vmem:[%s3 + $0x8] sm:$0xff]
    %v572 = vld [vmem:[%s3 + $0x10] sm:$0xff]
    %v573 = vld [vmem:[%s3 + $0x18] sm:$0xff]
    %v574 = vsel %vm141, %v564, 0
    %576 = vmatpush.msra.mxu0 0.0
    %577 = vmatpush.msra.mxu0 0.0
    %578 = vmatpush.msra.mxu0 0.0
    %579 = vmatpush.msra.mxu0 0.0
    %580 = vmatpush.msra.mxu0 0.0
    %581 = vmatpush.msra.mxu0 0.0
    %582 = vmatpush.msra.mxu0 0.0
    %583 = vmatpush.msra.mxu0 0.0
    %584 = vmatpush.msra.mxu0 0.0
    %585 = vmatpush.msra.mxu0 0.0
    %586 = vmatpush.msra.mxu0 0.0
    %587 = vmatpush.msra.mxu0 0.0
    %588 = vmatpush.msra.mxu0 %v573
    %589 = vmatpush.msra.mxu0 %v572
    %590 = vmatpush.msra.mxu0 %v571
    %591 = vmatpush.msra.mxu0 %v570
    %592 = vmatmul.f32.gmra.mxu0 %v574
    %v593 = vpop.f32.mrf.mxu0
    %v594 = vadd.f32 0.0, %v593
    %595 = vdwg.mxu0
    %v596 = vadd.f32 %v569, %v594
    %v597 = vxor.u32 %v596, 2147483648
    %v598 = vmul.f32 %v597, 1.442695
    %v599 = vpow.pop %v598
    %v600 = vadd.f32 %v599, 1.0
    %v601 = vrcp.pop %v600
    %v602 = vmul.f32 %v600, %v601
    %v603 = vsub.f32 1.0, %v602
    %v604 = vmul.f32 %v601, %v603
    %v605 = vadd.f32 %v601, %v604
    %vm606 = vweird.f32 %v600
    %vm607 = vweird.f32 %v601
    %vm608 = vmor %vm606, %vm607
    %v609 = vsel %vm608, %v601, %v605
    %v610 = vand.u32 2147483647, %v600
    %vm611 = vcmp.eq.f32.partialorder %v610, 8.507059e+37
    %v612 = vand.u32 %v600, 2147483648
    %v613 = vor.u32 1.1754944e-38, %v612
    %v614 = vsel %vm611, %v613, %v609
    %v615 = vmul.f32 1.0, %v614
    %v616 = vtanh.pop %v596
    %v617 = vmul.f32 %v615, %v555
    %619 = vrot.lane.b32.xlu0 %v616, 64
    %v620 = vpop.permute.xlu0 %619
    %v622 = vmul.f32 %v615, %v620
    %624 = vrot.lane.b32.xlu0 %v622, 32
    %v625 = vpop.permute.xlu0 %624
    %v627 = vadd.f32 %v617, %v625
    %v628 = vtanh.pop %v627
    %630 = vrot.lane.b32.xlu0 %v628, 64
    %v631 = vpop.permute.xlu0 %630
    %v633 = vmul.f32 %v615, %v631
    %635 = vrot.lane.b32.xlu0 %v633, 32
    %v636 = vpop.permute.xlu0 %635
    %s638 = scalar_lea.vmem [#allocation3], 48
    %639 = vst.msk [vmem:[%s638] sm:$0xff] %vm141, %v636
    %s640 = scalar_lea.vmem [#allocation2], 56
    %v641 = vld [vmem:[%s640] sm:$0xff]
    %v642 = vld [vmem:[%s3] sm:$0xff]
    %v643 = vld [vmem:[%s3 + $0x8] sm:$0xff]
    %v644 = vld [vmem:[%s3 + $0x10] sm:$0xff]
    %v645 = vld [vmem:[%s3 + $0x18] sm:$0xff]
    %v646 = vsel %vm141, %v636, 0
    %648 = vmatpush.msra.mxu0 0.0
    %649 = vmatpush.msra.mxu0 0.0
    %650 = vmatpush.msra.mxu0 0.0
    %651 = vmatpush.msra.mxu0 0.0
    %652 = vmatpush.msra.mxu0 0.0
    %653 = vmatpush.msra.mxu0 0.0
    %654 = vmatpush.msra.mxu0 0.0
    %655 = vmatpush.msra.mxu0 0.0
    %656 = vmatpush.msra.mxu0 0.0
    %657 = vmatpush.msra.mxu0 0.0
    %658 = vmatpush.msra.mxu0 0.0
    %659 = vmatpush.msra.mxu0 0.0
    %660 = vmatpush.msra.mxu0 %v645
    %661 = vmatpush.msra.mxu0 %v644
    %662 = vmatpush.msra.mxu0 %v643
    %663 = vmatpush.msra.mxu0 %v642
    %664 = vmatmul.f32.gmra.mxu0 %v646
    %v665 = vpop.f32.mrf.mxu0
    %v666 = vadd.f32 0.0, %v665
    %667 = vdwg.mxu0
    %v668 = vadd.f32 %v641, %v666
    %v669 = vxor.u32 %v668, 2147483648
    %v670 = vmul.f32 %v669, 1.442695
    %v671 = vpow.pop %v670
    %v672 = vadd.f32 %v671, 1.0
    %v673 = vrcp.pop %v672
    %v674 = vmul.f32 %v672, %v673
    %v675 = vsub.f32 1.0, %v674
    %v676 = vmul.f32 %v673, %v675
    %v677 = vadd.f32 %v673, %v676
    %vm678 = vweird.f32 %v672
    %vm679 = vweird.f32 %v673
    %vm680 = vmor %vm678, %vm679
    %v681 = vsel %vm680, %v673, %v677
    %v682 = vand.u32 2147483647, %v672
    %vm683 = vcmp.eq.f32.partialorder %v682, 8.507059e+37
    %v684 = vand.u32 %v672, 2147483648
    %v685 = vor.u32 1.1754944e-38, %v684
    %v686 = vsel %vm683, %v685, %v681
    %v687 = vmul.f32 1.0, %v686
    %v688 = vtanh.pop %v668
    %v689 = vmul.f32 %v687, %v627
    %691 = vrot.lane.b32.xlu0 %v688, 64
    %v692 = vpop.permute.xlu0 %691
    %v694 = vmul.f32 %v687, %v692
    %696 = vrot.lane.b32.xlu0 %v694, 32
    %v697 = vpop.permute.xlu0 %696
    %v699 = vadd.f32 %v689, %v697
    %v700 = vtanh.pop %v699
    %702 = vrot.lane.b32.xlu0 %v700, 64
    %v703 = vpop.permute.xlu0 %702
    %v705 = vmul.f32 %v687, %v703
    %707 = vrot.lane.b32.xlu0 %v705, 32
    %v708 = vpop.permute.xlu0 %707
    %s710 = scalar_lea.vmem [#allocation3], 56
    %711 = vst.msk [vmem:[%s710] sm:$0xff] %vm141, %v708
    %712 = vst.msk [vmem:[%s7] sm:$0xff] %vm141, %v708
    %714 = vrot.lane.b32.xlu0 %v699, 96
    %v715 = vpop.permute.xlu0 %714
    %717 = vst.msk [vmem:[%s8] sm:$0xff] %vm141, %v715
    %v718 = vld [vmem:[#allocation3] sm:$0xff]
    %v719 = vld [vmem:[#allocation3 + $0x8] sm:$0xff]
    %v720 = vld [vmem:[#allocation3 + $0x10] sm:$0xff]
    %v721 = vld [vmem:[#allocation3 + $0x18] sm:$0xff]
    %v722 = vld [vmem:[#allocation3 + $0x20] sm:$0xff]
    %v723 = vld [vmem:[#allocation3 + $0x28] sm:$0xff]
    %v724 = vld [vmem:[#allocation3 + $0x30] sm:$0xff]
    %v725 = vld [vmem:[#allocation3 + $0x38] sm:$0xff]
    %v726 = vld [vmem:[#allocation4] sm:$0xff]
    %v727 = vld [vmem:[#allocation4 + $0x8] sm:$0xff]
    %v728 = vld [vmem:[#allocation4 + $0x10] sm:$0xff]
    %v729 = vld [vmem:[#allocation4 + $0x18] sm:$0xff]
    %v730 = vld [vmem:[%s5] sm:$0x1]
    %v732 = vperm.slane %v730, 0
    %v735 = vsel %vm141, %v718, 0
    %v738 = vsel %vm141, %v719, 0
    %v741 = vsel %vm141, %v720, 0
    %v744 = vsel %vm141, %v721, 0
    %v747 = vsel %vm141, %v722, 0
    %v750 = vsel %vm141, %v723, 0
    %v753 = vsel %vm141, %v724, 0
    %v756 = vsel %vm141, %v725, 0
    %758 = vmatpush.msra.mxu0 0.0
    %759 = vmatpush.msra.mxu0 0.0
    %760 = vmatpush.msra.mxu0 0.0
    %761 = vmatpush.msra.mxu0 0.0
    %762 = vmatpush.msra.mxu0 0.0
    %763 = vmatpush.msra.mxu0 0.0
    %764 = vmatpush.msra.mxu0 0.0
    %765 = vmatpush.msra.mxu0 0.0
    %766 = vmatpush.msra.mxu0 0.0
    %767 = vmatpush.msra.mxu0 0.0
    %768 = vmatpush.msra.mxu0 0.0
    %769 = vmatpush.msra.mxu0 0.0
    %770 = vmatpush.msra.mxu0 %v729
    %771 = vmatpush.msra.mxu0 %v728
    %772 = vmatpush.msra.mxu0 %v727
    %773 = vmatpush.msra.mxu0 %v726
    %774 = vmatmul.f32.gmra.mxu0 %v735
    %v775 = vpop.f32.mrf.mxu0
    %v776 = vadd.f32 %v732, %v775
    %777 = vmatmul.f32.gmra.mxu0 %v738
    %v778 = vpop.f32.mrf.mxu0
    %v779 = vadd.f32 %v732, %v778
    %780 = vmatmul.f32.gmra.mxu0 %v741
    %v781 = vpop.f32.mrf.mxu0
    %v782 = vadd.f32 %v732, %v781
    %783 = vmatmul.f32.gmra.mxu0 %v744
    %v784 = vpop.f32.mrf.mxu0
    %v785 = vadd.f32 %v732, %v784
    %786 = vmatmul.f32.gmra.mxu0 %v747
    %v787 = vpop.f32.mrf.mxu0
    %v788 = vadd.f32 %v732, %v787
    %789 = vmatmul.f32.gmra.mxu0 %v750
    %v790 = vpop.f32.mrf.mxu0
    %v791 = vadd.f32 %v732, %v790
    %792 = vmatmul.f32.gmra.mxu0 %v753
    %v793 = vpop.f32.mrf.mxu0
    %v794 = vadd.f32 %v732, %v793
    %795 = vmatmul.f32.gmra.mxu0 %v756
    %v796 = vpop.f32.mrf.mxu0
    %v797 = vadd.f32 %v732, %v796
    %798 = vdwg.mxu0
    %vm799 = vcmask 392192
    %800 = vst.msk [vmem:[%s6] sm:$0xff] %vm799, %v776
    %801 = vst.msk [vmem:[%s6 + $0x8] sm:$0xff] %vm799, %v779
    %802 = vst.msk [vmem:[%s6 + $0x10] sm:$0xff] %vm799, %v782
    %803 = vst.msk [vmem:[%s6 + $0x18] sm:$0xff] %vm799, %v785
    %804 = vst.msk [vmem:[%s6 + $0x20] sm:$0xff] %vm799, %v788
    %805 = vst.msk [vmem:[%s6 + $0x28] sm:$0xff] %vm799, %v791
    %806 = vst.msk [vmem:[%s6 + $0x30] sm:$0xff] %vm799, %v794
    %807 = vst.msk [vmem:[%s6 + $0x38] sm:$0xff] %vm799, %v797
    // Predicated region
    $region30: #{lstm_linear_forward.1} parent=1 // pred_check
      _
    $region31: #{lstm_linear_forward.1} parent=1 // pred_check_branch
      %809 = sbr.rel (0) target = $region33
    $region32: #{lstm_linear_forward.1} parent=1 // pred_region
      _
    $region33: #{lstm_linear_forward.1} parent=1 // pred_fallthru
      _
    // Predicated region
    $region34: #{lstm_linear_forward.1} parent=1 // pred_check
      _
    $region35: #{lstm_linear_forward.1} parent=1 // pred_check_branch
      %811 = sbr.rel (0) target = $region37
    $region36: #{lstm_linear_forward.1} parent=1 // pred_region
      _
    $region37: #{lstm_linear_forward.1} parent=1 // pred_fallthru
      _
    // Predicated region
    $region38: #{lstm_linear_forward.1} parent=1 // pred_check
      _
    $region39: #{lstm_linear_forward.1} parent=1 // pred_check_branch
      %813 = sbr.rel (0) target = $region41
    $region40: #{lstm_linear_forward.1} parent=1 // pred_region
      _
    $region41: #{lstm_linear_forward.1} parent=1 // pred_fallthru
      _
    // Predicated region
    $region42: #{lstm_linear_forward.1} parent=1 // pred_check
      _
    $region43: #{lstm_linear_forward.1} parent=1 // pred_check_branch
      %815 = sbr.rel (0) target = $region45
    $region44: #{lstm_linear_forward.1} parent=1 // pred_region
      _
    $region45: #{lstm_linear_forward.1} parent=1 // pred_fallthru
      _
    // Predicated region
    $region46: #{lstm_linear_forward.1} parent=1 // pred_check
      _
    $region47: #{lstm_linear_forward.1} parent=1 // pred_check_branch
      %817 = sbr.rel (0) target = $region49
    $region48: #{lstm_linear_forward.1} parent=1 // pred_region
      _
    $region49: #{lstm_linear_forward.1} parent=1 // pred_fallthru
      _
    // Predicated region
    $region50: #{lstm_linear_forward.1} parent=1 // pred_check
      _
    $region51: #{lstm_linear_forward.1} parent=1 // pred_check_branch
      %819 = sbr.rel (0) target = $region53
    $region52: #{lstm_linear_forward.1} parent=1 // pred_region
      _
    $region53: #{lstm_linear_forward.1} parent=1 // pred_fallthru
      _
    %820 = vsyncpa [#allocation5], 1

</llo_original>
